<compile_context>
chip_gen: v5e
topology: v5e:2x2
jax: 0.10.0
libtpu: 0.0.40
codegen_flags: <defaults>
</compile_context>

<pallas_src>
import jax
import jax.numpy as jnp
from jax.experimental import pallas as pl
from jax.experimental.pallas import tpu as pltpu

NEG_INF = -1e9                      # masked_fill value used by the attention (no softmax afterwards)
_STEP_OVERHEAD_BYTES = 256 << 10    # ~0.35 us fixed per-grid-step overhead expressed as HBM bytes


def _round_up(x, m):
    return ((x + m - 1) // m) * m


# --------------------------------------------------------------------------------------
# Kernels
# --------------------------------------------------------------------------------------
def _graph_copy_kernel_bnd(ne_ref, q_ref, mask_ref, out_ref):
    # ne_ref   : (TB, N, D) f32   node_embedding block (D on lanes, N on sublanes)
    # q_ref    : (TB, D)    f32   pre-projected query block
    # mask_ref : (TB, N)    i8/i32 combined efficient mask block (nonzero = masked out)
    # out_ref  : (TB, N)    f32   node logits block (N on lanes -> dense stores)
    ne = ne_ref[...]                                   # (TB, N, D)
    q = q_ref[...]                                     # (TB, D)
    logits = jnp.sum(ne * q[:, None, :], axis=-1)      # lane reduce over D -> (TB, N)
    mask = mask_ref[...].astype(jnp.float32)           # widen narrow-int mask before compare
    out_ref[...] = jnp.where(mask != 0.0, jnp.float32(NEG_INF), logits).astype(out_ref.dtype)


def _graph_copy_kernel_bdn(ne_ref, q_ref, mask_ref, out_ref):
    # ne_ref   : (TB, D, N) f32   node_embedding block (N on lanes, D on sublanes)
    # q_ref    : (TB, D)    f32
    # mask_ref : (TB, N)    i8/i32
    # out_ref  : (TB, N)    f32
    ne = ne_ref[...]                                   # (TB, D, N)
    q = q_ref[...]                                     # (TB, D)
    logits = jnp.sum(ne * q[:, :, None], axis=1)       # sublane reduce over D -> (TB, N)
    mask = mask_ref[...].astype(jnp.float32)
    out_ref[...] = jnp.where(mask != 0.0, jnp.float32(NEG_INF), logits).astype(out_ref.dtype)


# --------------------------------------------------------------------------------------
# Sizing helpers
# --------------------------------------------------------------------------------------
def _hardware_params():
    """Generation-aware (max padded ne-block bytes, grid-sharing TensorCores)."""
    kind = ""
    try:
        kind = jax.devices()[0].device_kind.lower()
    except Exception:
        pass
    if "v7" in kind:
        return {"max_block_bytes": 8 << 20, "num_cores": 2}    # 64 MiB physical VMEM, 2 TCs
    if "v6" in kind:
        return {"max_block_bytes": 10 << 20, "num_cores": 1}   # amortize per-step overhead at 1.4 TB/s
    if "v5" in kind:
        return {"max_block_bytes": 4 << 20, "num_cores": 1}    # conservative: 16 MiB scoped default
    return {"max_block_bytes": 4 << 20, "num_cores": 1}


def _plane_padded_bytes(N, D, layout):
    """Padded VMEM bytes of ONE batch row of the f32 node_embedding block."""
    if layout == "bnd":
        return _round_up(N, 8) * _round_up(D, 128) * 4
    return _round_up(D, 8) * _round_up(N, 128) * 4


def _padded_block_bytes(tb, N, D, layout, mask_itemsize):
    ne = tb * _plane_padded_bytes(N, D, layout)
    q = _round_up(tb, 8) * _round_up(D, 128) * 4
    mask_sub = 32 if mask_itemsize == 1 else 8
    mask = _round_up(tb, mask_sub) * _round_up(N, 128) * mask_itemsize
    out = _round_up(tb, 8) * _round_up(N, 128) * 4
    return ne, q, mask, out


def _choose_block_batch(B, plane_bytes, max_block_bytes, num_cores):
    """Pick TB (== B or multiple of 8) minimizing busiest-core wall-clock proxy."""
    cands = []
    if B <= 8 or B * plane_bytes <= max_block_bytes:
        cands.append(B)                      # whole batch in one block if it fits the budget
    tb = 8
    while tb < B:
        if tb * plane_bytes > max_block_bytes:
            break
        cands.append(tb)
        tb += 8
    if not cands:
        cands.append(min(B, 8))              # forced minimum legal block

    def cost(t):
        grid = -(-B // t)
        busiest = -(-grid // num_cores)      # steps on the busiest TensorCore
        return busiest * (t * plane_bytes + _STEP_OVERHEAD_BYTES)

    return min(cands, key=lambda t: (cost(t), -(-B // t)))


# --------------------------------------------------------------------------------------
# Wrapper
# --------------------------------------------------------------------------------------
def graph_copy(node_embedding, node_efficient, head_flag_bit_matrix, h_c_t, W, bias,
               *, block_batch=None, use_pallas=None, ne_layout="bnd"):
    """Pallas implementation of GraphCopy.forward. Returns node_logits [B, N].

    ne_layout="bnd": node_embedding is (B, N, D)  (module's native layout).
    ne_layout="bdn": node_embedding is (B, D, N)  (lane-dense in N; use only if the
                     producer emits this layout — we never transpose here).
    """
    assert ne_layout in ("bnd", "bdn")
    node_embedding = node_embedding.astype(jnp.float32)
    D = W.shape[0]
    if ne_layout == "bnd":
        B, N, d_ = node_embedding.shape
    else:
        B, d_, N = node_embedding.shape
    assert d_ == D, "node_embedding embed dim must match W.shape[0]"

    # --- hoisted query projection: one batched XLA matmul (MXU-friendly), not per-step M=1 ---
    q = (h_c_t.astype(jnp.float32) @ W.astype(jnp.float32).T
         + bias.astype(jnp.float32))                                     # (B, D)

    # --- combined mask computed once: (1 - node_efficient) | head_flag_bit_matrix ---
    eff_mask_i32 = ((1 - node_efficient.astype(jnp.int32))
                    | head_flag_bit_matrix.astype(jnp.int32))            # (B, N), nonzero = masked

    # Small problems: fixed pallas_call dispatch + pipeline warm-up dominates; let XLA fuse.
    ne_bytes = node_embedding.size * node_embedding.dtype.itemsize
    if use_pallas is None:
        use_pallas = ne_bytes >= (4 << 20)
    if not use_pallas:
        eq = "bnd,bd->bn" if ne_layout == "bnd" else "bdn,bd->bn"
        logits = jnp.einsum(eq, node_embedding, q)
        return jnp.where(eff_mask_i32 != 0, jnp.float32(NEG_INF), logits)

    hw = _hardware_params()
    plane_bytes = _plane_padded_bytes(N, D, ne_layout)
    tb = block_batch if block_batch is not None else _choose_block_batch(
        B, plane_bytes, hw["max_block_bytes"], hw["num_cores"])
    assert tb == B or tb % 8 == 0, "block_batch must equal B or be a multiple of 8"

    # int8 mask (4x less DMA) only when the block avoids packed-sublane alignment edge cases.
    mask_dtype = jnp.int8 if (tb == B or tb % 32 == 0) else jnp.int32
    eff_mask = eff_mask_i32.astype(mask_dtype)

    # Explicit scoped-VMEM limit from the actual double-buffered padded block footprint.
    ne_b, q_b, m_b, o_b = _padded_block_bytes(tb, N, D, ne_layout,
                                              jnp.dtype(mask_dtype).itemsize)
    vmem_limit = int(min(max(2 * (ne_b + q_b + m_b + o_b) + (2 << 20), 16 << 20), 48 << 20))

    if ne_layout == "bnd":
        kernel = _graph_copy_kernel_bnd
        ne_spec = pl.BlockSpec((tb, N, D), lambda i: (i, 0, 0))
    else:
        kernel = _graph_copy_kernel_bdn
        ne_spec = pl.BlockSpec((tb, D, N), lambda i: (i, 0, 0))

    grid = (pl.cdiv(B, tb),)
    out = pl.pallas_call(
        kernel,
        out_shape=jax.ShapeDtypeStruct((B, N), jnp.float32),
        grid_spec=pltpu.PrefetchScalarGridSpec(
            num_scalar_prefetch=0,
            grid=grid,
            in_specs=[
                ne_spec,                                         # node_embedding block
                pl.BlockSpec((tb, D), lambda i: (i, 0)),         # pre-projected query block
                pl.BlockSpec((tb, N), lambda i: (i, 0)),         # combined mask block
            ],
            out_specs=pl.BlockSpec((tb, N), lambda i: (i, 0)),   # lane-dense logits block
        ),
        compiler_params=pltpu.CompilerParams(
            dimension_semantics=("parallel",),                   # batch blocks shard across TCs
            vmem_limit_bytes=vmem_limit),
    )(node_embedding, q, eff_mask)
    return out


def _reference(node_embedding, node_efficient, head_flag_bit_matrix, h_c_t, W, bias):
    q = h_c_t @ W.T + bias                                               # (B, D)
    logits = jnp.einsum("bnd,bd->bn", node_embedding, q)                 # (B, N)
    mask = (1 - node_efficient.astype(jnp.int32)) | head_flag_bit_matrix.astype(jnp.int32)
    return jnp.where(mask != 0, jnp.float32(NEG_INF), logits)


if __name__ == "__main__":
    key = jax.random.PRNGKey(0)

    # --- case 1: tiny shapes matching the module (forces the Pallas path, int8 mask) ---
    B, N, D, H = 2, 8, 32, 32   # batch, num graph nodes, node_embed_dim, hidden_dim
    k1, k2, k3, k4, k5, k6, k7 = jax.random.split(key, 7)

    node_embedding = jax.random.normal(k1, (B, N, D), jnp.float32)
    h_c_t = jax.random.normal(k2, (B, H), jnp.float32)
    node_efficient = (jax.random.uniform(k3, (B, N)) > 0.3).astype(jnp.int32)
    head_flag_bit_matrix = (jax.random.uniform(k4, (B, N)) > 0.8).astype(jnp.int32)
    W = 0.1 * jax.random.normal(k5, (D, H), jnp.float32)
    bias = 0.01 * jax.random.normal(k6, (D,), jnp.float32)

    ref = _reference(node_embedding, node_efficient, head_flag_bit_matrix, h_c_t, W, bias)

    out1 = graph_copy(node_embedding, node_efficient, head_flag_bit_matrix,
                      h_c_t, W, bias, use_pallas=True)
    jax.block_until_ready(out1)
    assert out1.shape == (B, N)
    assert jnp.allclose(out1, ref, atol=1e-4, rtol=1e-4), "case1: pallas mismatch vs reference"

    # auto-gate path (tiny problem -> fused XLA bypass) must agree too
    out1b = graph_copy(node_embedding, node_efficient, head_flag_bit_matrix, h_c_t, W, bias)
    jax.block_until_ready(out1b)
    assert jnp.allclose(out1b, ref, atol=1e-4, rtol=1e-4), "case1: bypass mismatch vs reference"

    # --- case 2: multi-block batch tiling (bnd layout, grid of 2 parallel blocks, int32 mask) ---
    B2, N2, D2, H2 = 16, 128, 64, 48
    j1, j2, j3, j4, j5, j6 = jax.random.split(k7, 6)
    ne2 = jax.random.normal(j1, (B2, N2, D2), jnp.float32)
    h2 = jax.random.normal(j2, (B2, H2), jnp.float32)
    eff2 = (jax.random.uniform(j3, (B2, N2)) > 0.3).astype(jnp.int32)
    head2 = (jax.random.uniform(j4, (B2, N2)) > 0.8).astype(jnp.int32)
    W2 = 0.1 * jax.random.normal(j5, (D2, H2), jnp.float32)
    b2 = 0.01 * jax.random.normal(j6, (D2,), jnp.float32)

    ref2 = _reference(ne2, eff2, head2, h2, W2, b2)

    out2 = graph_copy(ne2, eff2, head2, h2, W2, b2, use_pallas=True, block_batch=8)
    jax.block_until_ready(out2)
    assert out2.shape == (B2, N2)
    assert jnp.allclose(out2, ref2, atol=1e-3, rtol=1e-4), "case2: mismatch vs reference"

    # --- case 3: lane-dense (B, D, N) layout path (producer-supplied; N multiple of 128) ---
    ne2_dn = jnp.transpose(ne2, (0, 2, 1))   # stand-in for a producer that emits (B, D, N)
    out3 = graph_copy(ne2_dn, eff2, head2, h2, W2, b2,
                      use_pallas=True, block_batch=8, ne_layout="bdn")
    jax.block_until_ready(out3)
    assert out3.shape == (B2, N2)
    assert jnp.allclose(out3, ref2, atol=1e-3, rtol=1e-4), "case3: bdn layout mismatch vs reference"

    print("KERNEL_OK")
</pallas_src>

<mosaic_0001>
module attributes {stable_mosaic.version = 11 : i64} {
  func.func @_graph_copy_kernel_bnd(%arg0: i32, %arg1: memref<2x8x32xf32, #tpu.memory_space<vmem>>, %arg2: memref<2x32xf32, #tpu.memory_space<vmem>>, %arg3: memref<2x8xi8, #tpu.memory_space<vmem>>, %arg4: memref<2x8xf32, #tpu.memory_space<vmem>>) attributes {dimension_semantics = [#tpu.dimension_semantics<parallel>], iteration_bounds = array<i64: 1>, scalar_prefetch = 0 : i64, scratch_operands = 0 : i64, tpu.core_type = #tpu.core_type<tc>, window_params = [{transform_indices = @transform_0, window_bounds = array<i64: 2, 8, 32>}, {transform_indices = @transform_1, window_bounds = array<i64: 2, 32>}, {transform_indices = @transform_2, window_bounds = array<i64: 2, 8>}, {transform_indices = @transform_3, window_bounds = array<i64: 2, 8>}]} {
    %c0 = arith.constant 0 : index
    %c0_0 = arith.constant 0 : index
    %c0_1 = arith.constant 0 : index
    %0 = vector.load %arg1[%c0, %c0_0, %c0_1] : memref<2x8x32xf32, #tpu.memory_space<vmem>>, vector<2x8x32xf32>
    %c0_2 = arith.constant 0 : index
    %c0_3 = arith.constant 0 : index
    %1 = vector.load %arg2[%c0_2, %c0_3] : memref<2x32xf32, #tpu.memory_space<vmem>>, vector<2x32xf32>
    %2 = vector.shape_cast %1 : vector<2x32xf32> to vector<2x1x32xf32>
    %3 = vector.broadcast %2 : vector<2x1x32xf32> to vector<2x8x32xf32>
    %4 = arith.mulf %0, %3 : vector<2x8x32xf32>
    %cst = arith.constant dense<0.000000e+00> : vector<2x8xf32>
    %5 = vector.multi_reduction <add>, %4, %cst [2] : vector<2x8x32xf32> to vector<2x8xf32>
    %c0_4 = arith.constant 0 : index
    %c0_5 = arith.constant 0 : index
    %6 = vector.load %arg3[%c0_4, %c0_5] : memref<2x8xi8, #tpu.memory_space<vmem>>, vector<2x8xi8>
    %7 = arith.sitofp %6 : vector<2x8xi8> to vector<2x8xf32>
    %cst_6 = arith.constant 0.000000e+00 : f32
    %8 = vector.broadcast %cst_6 : f32 to vector<2x8xf32>
    %9 = arith.cmpf one, %7, %8 : vector<2x8xf32>
    %cst_7 = arith.constant -1.000000e+09 : f32
    %10 = vector.broadcast %cst_7 : f32 to vector<2x8xf32>
    %11 = arith.select %9, %10, %5 : vector<2x8xi1>, vector<2x8xf32>
    %c0_8 = arith.constant 0 : index
    %c0_9 = arith.constant 0 : index
    %12 = vector.load %arg4[%c0_8, %c0_9] : memref<2x8xf32, #tpu.memory_space<vmem>>, vector<2x8xf32>
    tpu.vector_store %arg4[%c0_8, %c0_9], %11 {strides = array<i32>} : memref<2x8xf32, #tpu.memory_space<vmem>>, vector<2x8xf32>,
    return
  }
  func.func @transform_0(%arg0: i32) -> (i32, i32, i32) {
    %c0_i32 = arith.constant 0 : i32
    %c0_i32_0 = arith.constant 0 : i32
    %c0_i32_1 = arith.constant 0 : i32
    return %arg0, %c0_i32, %c0_i32_0 : i32, i32, i32
  }
  func.func @transform_1(%arg0: i32) -> (i32, i32) {
    %c0_i32 = arith.constant 0 : i32
    %c0_i32_0 = arith.constant 0 : i32
    return %arg0, %c0_i32 : i32, i32
  }
  func.func @transform_2(%arg0: i32) -> (i32, i32) {
    %c0_i32 = arith.constant 0 : i32
    %c0_i32_0 = arith.constant 0 : i32
    return %arg0, %c0_i32 : i32, i32
  }
  func.func @transform_3(%arg0: i32) -> (i32, i32) {
    %c0_i32 = arith.constant 0 : i32
    %c0_i32_0 = arith.constant 0 : i32
    return %arg0, %c0_i32 : i32, i32
  }
}

</mosaic_0001>

<llo_original>
// kernel: tpu_custom_call.1
$region0: #{tpu_custom_call.1}
  #allocation0 [shape = 'u32[]', space=smem, size = 0x4, offset = 0x4, fixed_abs, tag = 'smem constant byte address 0x4 - core index']
  #allocation1 [shape = 'u32[72,128]{1,0:T(1,128)}', space=vmem, size = 0x9000, scoped, tag = 'internal scratch']
  %s0 = inlined_call_operand.hbm [shape: f32[2,8,32], index: 0, kind: input, shape index: {}]
  %s1 = inlined_call_operand.hbm [shape: f32[2,32], index: 1, kind: input, shape index: {}]
  %s2 = inlined_call_operand.vmem [shape: s8[2,8], index: 2, kind: input, shape index: {}]
  %s3 = inlined_call_operand.hbm [shape: f32[2,8], index: 3, kind: output, shape index: {}]
  %s4 = sld [smem:[#allocation0]]
  $region30: #{tpu_custom_call.1} parent=0
    _
  %s6 = ssub.s32 1, %s4
  %s7 = scalar_select 0, %s6, %s4
  $region1: #{tpu_custom_call.1} parent=0
    #allocation2 [shape = 'u8[8192]{0}', space=vmem, size = 0x2000, scoped, tag = 'input window, operand 0, single buffered']
    #allocation3 [shape = 's32[1]{0}', space=sflag, size = 0x4, scoped, tag = 'scoped memory for tpu_custom_call.1']
    #allocation4 [shape = 's32[1]{0}', space=sflag, size = 0x4, scoped, tag = 'scoped memory for tpu_custom_call.1']
    #allocation5 [shape = 'u8[1024]{0}', space=vmem, size = 0x400, scoped, tag = 'input window, operand 1, single buffered']
    #allocation6 [shape = 's32[1]{0}', space=sflag, size = 0x4, scoped, tag = 'scoped memory for tpu_custom_call.1']
    #allocation7 [shape = 'u8[1024]{0}', space=vmem, size = 0x400, scoped, tag = 'output window, operand 0, single buffered']
    %8 = vsyncpa [#allocation3], 0
    %9 = vsyncpa [#allocation6], 0
    %10 = vsyncpa [#allocation4], 0
    // Predicated region
    $region2: #{tpu_custom_call.1} parent=1 // pred_check
      _
    $region3: #{tpu_custom_call.1} parent=1 // pred_check_branch
      %12 = sbr.rel (0) target = $region5
    $region4: #{tpu_custom_call.1} parent=1 // pred_region
      %14 = vsyncadd [#allocation3], 0
      %s15 = sshll.u32 %s0, 4
      %s16 = int_to_ptr.hbm [resolvable:$true] %s15
      %s17 = sshll.u32 [#allocation2], 4
      %s18 = int_to_ptr.vmem [resolvable:$true] %s17
      %23 = dma.hbm_to_vmem [thread:$0]  %s16, 256, %s18, [#allocation3], 128, 128, 8
    $region5: #{tpu_custom_call.1} parent=1 // pred_fallthru
      _
    // Predicated region
    $region6: #{tpu_custom_call.1} parent=1 // pred_check
      _
    $region7: #{tpu_custom_call.1} parent=1 // pred_check_branch
      %25 = sbr.rel (0) target = $region9
    $region8: #{tpu_custom_call.1} parent=1 // pred_region
      %27 = vsyncadd [#allocation6], 0
      %s29 = sshll.u32 %s1, 4
      %s30 = int_to_ptr.hbm [resolvable:$true] %s29
      %s31 = sshll.u32 [#allocation5], 4
      %s32 = int_to_ptr.vmem [resolvable:$true] %s31
      %34 = dma.hbm_to_vmem [thread:$0]  %s30, 32, %s32, [#allocation6]
    $region9: #{tpu_custom_call.1} parent=1 // pred_fallthru
      _
    // Predicated region
    $region10: #{tpu_custom_call.1} parent=1 // pred_check
      _
    $region11: #{tpu_custom_call.1} parent=1 // pred_check_branch
      %36 = sbr.rel (0) target = $region13
    $region12: #{tpu_custom_call.1} parent=1 // pred_region
      _
    $region13: #{tpu_custom_call.1} parent=1 // pred_fallthru
      _
    // Predicated region
    $region14: #{tpu_custom_call.1} parent=1 // pred_check
      _
    $region15: #{tpu_custom_call.1} parent=1 // pred_check_branch
      %38 = sbr.rel (0) target = $region17
    $region16: #{tpu_custom_call.1} parent=1 // pred_region
      %40 = dma.done [#allocation3], 256
    $region17: #{tpu_custom_call.1} parent=1 // pred_fallthru
      _
    // Predicated region
    $region18: #{tpu_custom_call.1} parent=1 // pred_check
      _
    $region19: #{tpu_custom_call.1} parent=1 // pred_check_branch
      %42 = sbr.rel (0) target = $region21
    $region20: #{tpu_custom_call.1} parent=1 // pred_region
      %44 = dma.done [#allocation6], 32
    $region21: #{tpu_custom_call.1} parent=1 // pred_fallthru
      _
    %v45 = vld [vmem:[#allocation2] sm:$0xff]
    %v46 = vld [vmem:[#allocation2 + $0x8] sm:$0xff]
    %v47 = vld [vmem:[#allocation5] sm:$0x3]
    %v49 = vrot.slane %v47, 1
    %v50 = vperm.slane %v47, 0
    %v51 = vperm.slane %v49, 0
    %v54 = vmul.f32 %v45, %v50
    %v55 = vmul.f32 %v46, %v51
    %vm56 = vcmask 261120
    %v57 = vsel %vm56, %v54, 0.0
    %58 = vadd.xlane.f32.xlu0 %v57
    %v59 = vpop.xlane.xlu0 %58
    %v60 = vsel %vm56, %v55, 0.0
    %61 = vadd.xlane.f32.xlu0 %v60
    %v62 = vpop.xlane.xlu0 %61
    %v63 = vld [vmem:[%s2] sm:$0x1]
    %v64 = vunpack.c.0.s8 %v63
    %v65 = vcvt.s32.f32 %v64
    %vm66 = vcmp.ne.f32.partialorder %v65, 0.0
    %v70 = vunpack.c.l.s4 839922192
    %v71 = vunpack.c.0.s8 %v70
    %v72 = vperm.slane %v59, %v71
    %v74 = vunpack.c.l.s4 1985246804
    %v75 = vunpack.c.0.s8 %v74
    %v76 = vperm.slane %v59, %v75
    %v78 = vunpack.c.l.s4 839922192
    %v79 = vunpack.c.0.s8 %v78
    %v80 = vperm.slane %v62, %v79
    %v82 = vunpack.c.l.s4 1985246804
    %v83 = vunpack.c.0.s8 %v82
    %v84 = vperm.slane %v62, %v83
    %85 = vst [vmem:[#allocation1] ss:$2 sm:$0xff] %v72
    %s86 = scalar_lea.vmem [#allocation1], 1
    %87 = vst [vmem:[%s86] ss:$2 sm:$0xff] %v76
    %v88 = vld.sshfl [vmem:[#allocation1] sm:$0xff pattern:$0x75316420]
    %s89 = scalar_lea.vmem [#allocation1], 16
    %90 = vst [vmem:[%s89] ss:$2 sm:$0xff] %v80
    %s91 = scalar_lea.vmem [#allocation1], 17
    %92 = vst [vmem:[%s91] ss:$2 sm:$0xff] %v84
    %v93 = vld.sshfl [vmem:[#allocation1 + $0x10] sm:$0xff pattern:$0x75316420]
    %94 = vset.pattern.permute.xlu0 0
    %95 = vperm.xlu0 %94, %v88
    %v96 = vpop.permute.xlu0 %95
    %97 = vset.pattern.permute.xlu0 0
    %98 = vperm.xlu0 %97, %v93
    %v99 = vpop.permute.xlu0 %98
    %v100 = vlaneseq
    %v101 = vand.u32 %v100, 127
    %v102 = vperm.slane %v96, %v101
    %v103 = vperm.slane %v99, %v101
    %vm104 = vcmask 1041409
    %v105 = vsel %vm104, %v103, %v102
    %v107 = vsel %vm66, -1e+09, %v105
    %vm108 = vcmask 58368
    %109 = vst.msk [vmem:[#allocation7] sm:$0x3] %vm108, %v107
    // Predicated region
    $region22: #{tpu_custom_call.1} parent=1 // pred_check
      _
    $region23: #{tpu_custom_call.1} parent=1 // pred_check_branch
      %111 = sbr.rel (0) target = $region25
    $region24: #{tpu_custom_call.1} parent=1 // pred_region
      %113 = vsyncadd [#allocation4], 0
      %s115 = sshll.u32 [#allocation7], 4
      %s116 = int_to_ptr.vmem [resolvable:$true] %s115
      %s117 = sshll.u32 %s3, 4
      %s118 = int_to_ptr.hbm [resolvable:$true] %s117
      %120 = dma.vmem_to_hbm [thread:$0]  %s116, 32, %s118, [#allocation4]
    $region25: #{tpu_custom_call.1} parent=1 // pred_fallthru
      _
    // Predicated region
    $region26: #{tpu_custom_call.1} parent=1 // pred_check
      _
    $region27: #{tpu_custom_call.1} parent=1 // pred_check_branch
      %122 = sbr.rel (0) target = $region29
    $region28: #{tpu_custom_call.1} parent=1 // pred_region
      %124 = dma.done [#allocation4], 32
    $region29: #{tpu_custom_call.1} parent=1 // pred_fallthru
      _
    %125 = vsyncpa [#allocation3], 1
    %126 = vsyncpa [#allocation6], 1
    %127 = vsyncpa [#allocation4], 1

</llo_original>
